<compile_context>
chip_gen: v5e
topology: v5e:2x2
jax: 0.10.0
libtpu: 0.0.40
codegen_flags: <defaults>
</compile_context>

<pallas_src>
import functools

import jax
import jax.numpy as jnp
from jax.experimental import pallas as pl
from jax.experimental.pallas import tpu as pltpu


# ----------------------------- Pallas GRU kernel -----------------------------

def _gru_recurrence_kernel(gi_ref, w_hh_ref, b_hn_ref, out_ref, h_scr, *, unroll):
    """Serial GRU recurrence over one VMEM-resident chunk of time steps.

    PyTorch nn.GRU semantics (gate order r, z, n):
        r  = sigmoid(gi_r + (h W_hh^T)_r)           # b_ir + b_hr folded into gi
        z  = sigmoid(gi_z + (h W_hh^T)_z)           # b_iz + b_hz folded into gi
        n  = tanh   (gi_n + r * ((h W_hh^T)_n + b_hn))
        h' = (1 - z) * n + z * h

    gi_ref  : (T_chunk, B_d, 3H)  precomputed x @ W_ih^T + b_ih + [b_hr, b_hz, 0]
    w_hh_ref: (H, 3H)             W_hh^T
    b_hn_ref: (1, H)
    out_ref : (T_chunk, B_d, H)
    h_scr   : (B_d, H)            hidden state, carried across grid chunks
    """
    # Zero initial hidden state. NOTE: the chunk axis carries the hidden state
    # sequentially -> it must stay "arbitrary"; never mark it "parallel".
    @pl.when(pl.program_id(0) == 0)
    def _():
        h_scr[...] = jnp.zeros_like(h_scr)

    H = h_scr.shape[-1]
    t_chunk = gi_ref.shape[0]
    w_hh = w_hh_ref[...]                       # hoisted loads (loop-invariant)
    b_hn = b_hn_ref[...]

    def step(t, carry):
        h = h_scr[...]                         # (B_d, H)
        gi = gi_ref[t]                         # (B_d, 3H)
        gh = jnp.dot(h, w_hh, preferred_element_type=jnp.float32)
        r = jax.nn.sigmoid(gi[:, :H] + gh[:, :H])
        z = jax.nn.sigmoid(gi[:, H:2 * H] + gh[:, H:2 * H])
        n = jnp.tanh(gi[:, 2 * H:] + r * (gh[:, 2 * H:] + b_hn))
        h_new = (1.0 - z) * n + z * h
        h_scr[...] = h_new
        out_ref[t] = h_new
        return carry

    jax.lax.fori_loop(0, t_chunk, step, 0, unroll=unroll)


def gru_layer_pallas(x, w_ih_t, w_hh_t, b_comb, b_hn, *, max_chunk=128):
    """x: (T_d, B_d, D) f32 -> (T_d, B_d, H); zero initial hidden state."""
    T_d, B_d, D = x.shape
    H = w_hh_t.shape[0]

    # Hoisted input projection: one batched matmul for ALL dilated time steps
    # (removes an MXU push + bias add from the serial dependency chain).
    gi = (x.reshape(T_d * B_d, D) @ w_ih_t + b_comb).reshape(T_d, B_d, 3 * H)
    gi = gi.astype(jnp.float32)

    # Chunk the time axis so long sequences stay within VMEM; at these toy
    # sizes this is a single chunk / single grid step.
    # TODO(synk): halve max_chunk on v7x (64 MiB VMEM/TC) when scaling B/H up,
    #             and consider bf16 MXU operands on v6e/v7x.
    t_chunk = min(T_d, max_chunk)
    n_chunks = (T_d + t_chunk - 1) // t_chunk
    t_pad = n_chunks * t_chunk
    if t_pad != T_d:
        # Zero-padded trailing steps run after all real steps; their outputs
        # are trimmed below, so the recurrence result is unaffected.
        gi = jnp.concatenate(
            [gi, jnp.zeros((t_pad - T_d, B_d, 3 * H), gi.dtype)], axis=0)

    kernel = functools.partial(
        _gru_recurrence_kernel, unroll=True if t_chunk <= 32 else 8)

    out = pl.pallas_call(
        kernel,
        out_shape=jax.ShapeDtypeStruct((t_pad, B_d, H), jnp.float32),
        grid_spec=pltpu.PrefetchScalarGridSpec(
            num_scalar_prefetch=0,
            grid=(n_chunks,),
            in_specs=[
                pl.BlockSpec((t_chunk, B_d, 3 * H), lambda c: (c, 0, 0)),  # gi
                pl.BlockSpec((H, 3 * H), lambda c: (0, 0)),                # W_hh^T
                pl.BlockSpec((1, H), lambda c: (0, 0)),                    # b_hn
            ],
            out_specs=pl.BlockSpec((t_chunk, B_d, H), lambda c: (c, 0, 0)),
            scratch_shapes=[pltpu.VMEM((B_d, H), jnp.float32)],            # h carry
        ),
        compiler_params=pltpu.CompilerParams(
            dimension_semantics=("arbitrary",)),  # sequential hidden-state carry
    )(gi, w_hh_t, b_hn)
    return out[:T_d]


# --------------------------- pure-JAX GRU reference ---------------------------

def gru_layer_ref(x, w_ih_t, w_hh_t, b_comb, b_hn, **_):
    T_d, B_d, D = x.shape
    H = w_hh_t.shape[0]

    def step(h, xt):
        gi = xt @ w_ih_t + b_comb
        gh = h @ w_hh_t
        r = jax.nn.sigmoid(gi[:, :H] + gh[:, :H])
        z = jax.nn.sigmoid(gi[:, H:2 * H] + gh[:, H:2 * H])
        n = jnp.tanh(gi[:, 2 * H:] + r * (gh[:, 2 * H:] + b_hn))
        h_new = (1.0 - z) * n + z * h
        return h_new, h_new

    h0 = jnp.zeros((B_d, H), jnp.float32)
    _, ys = jax.lax.scan(step, h0, x)
    return ys


# ------------------------------- DRNN wrapper --------------------------------

DILATIONS = (1, 4, 16)


def _drnn_layer(gru_fn, inputs, rate, layer_params):
    """inputs: (T, B, D) time-major -> (T, B, H); matches DRNN.drnn_layer."""
    n_steps, B, D = inputs.shape
    w_ih_t, w_hh_t, b_comb, b_hn = layer_params

    # _pad_inputs
    dilated_steps = (n_steps + rate - 1) // rate
    pad = dilated_steps * rate - n_steps
    if pad:
        inputs = jnp.concatenate(
            [inputs, jnp.zeros((pad, B, D), inputs.dtype)], axis=0)

    # _prepare_inputs as a single pure reshape:
    #   (T_d*rate, B, D) -> (T_d, rate*B, D);   row t*rate+j, batch b
    #   lands at dilated row t, column j*B + b  (same as torch.cat of strides).
    dilated_inputs = inputs.reshape(dilated_steps, rate * B, D)

    # _apply_cell (zero initial hidden)
    dilated_outputs = gru_fn(dilated_inputs, w_ih_t, w_hh_t, b_comb, b_hn)

    # _split_outputs == inverse reshape; _unpad_outputs trims the padding.
    H = dilated_outputs.shape[-1]
    outputs = dilated_outputs.reshape(dilated_steps * rate, B, H)
    return outputs[:n_steps]


def drnn_forward(x, params, gru_fn=gru_layer_pallas):
    """x: (B, T, D) batch-first. Returns (final (B, T, H_last), [last step per layer])."""
    # TODO(synk): fuse the three dilation layers into a single pallas_call with
    # weights/activations held VMEM-resident (removes 2 dispatches + 2 HBM trips).
    inputs = jnp.transpose(x, (1, 0, 2))        # -> (T, B, D)
    outputs = []
    for layer_params, rate in zip(params, DILATIONS):
        inputs = _drnn_layer(gru_fn, inputs, rate, layer_params)
        outputs.append(inputs[-1])              # (B, H_i) last time step
    final = jnp.transpose(inputs, (1, 0, 2))    # back to batch-first
    return final, outputs


# ---------------------------- deterministic params ----------------------------

def init_drnn_params(key, n_input, n_hidden):
    """PyTorch nn.GRU-style uniform(-1/sqrt(H), 1/sqrt(H)) init, deterministic.

    Biases are pre-folded: b_comb = b_ih + [b_hr, b_hz, 0]; b_hn kept separate.
    Weights are pre-transposed for x @ W^T.
    """
    params = []
    in_dim = n_input
    for H in n_hidden:
        key, k1, k2, k3, k4 = jax.random.split(key, 5)
        bound = 1.0 / jnp.sqrt(jnp.float32(H))
        w_ih = jax.random.uniform(k1, (3 * H, in_dim), jnp.float32, -bound, bound)
        w_hh = jax.random.uniform(k2, (3 * H, H), jnp.float32, -bound, bound)
        b_ih = jax.random.uniform(k3, (3 * H,), jnp.float32, -bound, bound)
        b_hh = jax.random.uniform(k4, (3 * H,), jnp.float32, -bound, bound)
        b_comb = b_ih + jnp.concatenate([b_hh[:2 * H], jnp.zeros((H,), jnp.float32)])
        b_hn = b_hh[2 * H:]
        params.append((w_ih.T, w_hh.T, b_comb[None, :], b_hn[None, :]))
        in_dim = H
    return params


# ------------------------------------ main ------------------------------------

if __name__ == "__main__":
    B, T, D = 2, 8, 4                 # batch, seq length, input features
    n_hidden = [32, 32, 32]           # n_layers = 3 (one per dilation 1, 4, 16)

    key = jax.random.PRNGKey(0)
    kx, kp = jax.random.split(key)
    x = jax.random.normal(kx, (B, T, D), dtype=jnp.float32)
    params = init_drnn_params(kp, D, n_hidden)

    final, last_steps = drnn_forward(x, params, gru_fn=gru_layer_pallas)
    final = jax.block_until_ready(final)
    last_steps = [jax.block_until_ready(o) for o in last_steps]

    # sanity-check against a pure-JAX lax.scan GRU reference
    final_ref, last_ref = drnn_forward(x, params, gru_fn=gru_layer_ref)
    assert final.shape == (B, T, n_hidden[-1])
    assert all(o.shape == (B, h) for o, h in zip(last_steps, n_hidden))
    assert jnp.allclose(final, final_ref, atol=1e-5, rtol=1e-5)
    for o, o_ref in zip(last_steps, last_ref):
        assert jnp.allclose(o, o_ref, atol=1e-5, rtol=1e-5)

    print("KERNEL_OK")
</pallas_src>

<mosaic_0001>
module attributes {stable_mosaic.version = 11 : i64} {
  func.func @_gru_recurrence_kernel(%arg0: i32, %arg1: memref<8x2x96xf32, #tpu.memory_space<vmem>>, %arg2: memref<32x96xf32, #tpu.memory_space<vmem>>, %arg3: memref<1x32xf32, #tpu.memory_space<vmem>>, %arg4: memref<8x2x32xf32, #tpu.memory_space<vmem>>, %arg5: memref<2x32xf32, #tpu.memory_space<vmem>>) attributes {dimension_semantics = [#tpu.dimension_semantics<arbitrary>], iteration_bounds = array<i64: 1>, scalar_prefetch = 0 : i64, scratch_operands = 1 : i64, tpu.core_type = #tpu.core_type<tc>, window_params = [{transform_indices = @transform_0, window_bounds = array<i64: 8, 2, 96>}, {pipeline_mode = #tpu.pipeline_mode<synchronous>, transform_indices = @transform_1, window_bounds = array<i64: 32, 96>}, {pipeline_mode = #tpu.pipeline_mode<synchronous>, transform_indices = @transform_2, window_bounds = array<i64: 1, 32>}, {transform_indices = @transform_3, window_bounds = array<i64: 8, 2, 32>}]} {
    %c0_i32 = arith.constant 0 : i32
    %0 = arith.cmpi eq, %arg0, %c0_i32 : i32
    %1 = arith.extui %0 : i1 to i32
    %c0_i32_0 = arith.constant 0 : i32
    %2 = arith.cmpi ne, %1, %c0_i32_0 : i32
    scf.if %2 {
      %cst_100 = arith.constant 0.000000e+00 : f32
      %309 = vector.broadcast %cst_100 : f32 to vector<2x32xf32>
      %c0_101 = arith.constant 0 : index
      %c0_102 = arith.constant 0 : index
      %310 = vector.load %arg5[%c0_101, %c0_102] : memref<2x32xf32, #tpu.memory_space<vmem>>, vector<2x32xf32>
      tpu.vector_store %arg5[%c0_101, %c0_102], %309 {strides = array<i32>} : memref<2x32xf32, #tpu.memory_space<vmem>>, vector<2x32xf32>,
    } else {
    }
    %c0 = arith.constant 0 : index
    %c0_1 = arith.constant 0 : index
    %3 = vector.load %arg2[%c0, %c0_1] : memref<32x96xf32, #tpu.memory_space<vmem>>, vector<32x96xf32>
    %c0_2 = arith.constant 0 : index
    %c0_3 = arith.constant 0 : index
    %4 = vector.load %arg3[%c0_2, %c0_3] : memref<1x32xf32, #tpu.memory_space<vmem>>, vector<1x32xf32>
    %c0_i32_4 = arith.constant 0 : i32
    %c0_5 = arith.constant 0 : index
    %c0_6 = arith.constant 0 : index
    %5 = vector.load %arg5[%c0_5, %c0_6] : memref<2x32xf32, #tpu.memory_space<vmem>>, vector<2x32xf32>
    %6 = arith.index_cast %c0_i32_4 : i32 to index
    %c0_7 = arith.constant 0 : index
    %c0_8 = arith.constant 0 : index
    %7 = vector.load %arg1[%6, %c0_7, %c0_8] : memref<8x2x96xf32, #tpu.memory_space<vmem>>, vector<1x2x96xf32>
    %8 = vector.shape_cast %7 : vector<1x2x96xf32> to vector<2x96xf32>
    %cst = arith.constant dense<0.000000e+00> : vector<2x96xf32>
    %9 = tpu.matmul %5, %3, %cst {dimension_numbers = #tpu.dot_dimension_numbers<[1], [0], [0], [1], [0, 0, 1, 1], [], []>} : vector<2x32xf32>, vector<32x96xf32>, vector<2x96xf32> -> vector<2x96xf32>
    %10 = vector.extract_strided_slice %8 {offsets = [0, 0], sizes = [2, 32], strides = [1, 1]} : vector<2x96xf32> to vector<2x32xf32>
    %11 = vector.extract_strided_slice %9 {offsets = [0, 0], sizes = [2, 32], strides = [1, 1]} : vector<2x96xf32> to vector<2x32xf32>
    %12 = arith.addf %10, %11 : vector<2x32xf32>
    %13 = arith.negf %12 : vector<2x32xf32>
    %14 = math.exp %13 : vector<2x32xf32>
    %cst_9 = arith.constant 1.000000e+00 : f32
    %15 = vector.broadcast %cst_9 : f32 to vector<2x32xf32>
    %16 = arith.addf %15, %14 : vector<2x32xf32>
    %17 = arith.divf %15, %16 : vector<2x32xf32>
    %18 = vector.extract_strided_slice %8 {offsets = [0, 32], sizes = [2, 32], strides = [1, 1]} : vector<2x96xf32> to vector<2x32xf32>
    %19 = vector.extract_strided_slice %9 {offsets = [0, 32], sizes = [2, 32], strides = [1, 1]} : vector<2x96xf32> to vector<2x32xf32>
    %20 = arith.addf %18, %19 : vector<2x32xf32>
    %21 = arith.negf %20 : vector<2x32xf32>
    %22 = math.exp %21 : vector<2x32xf32>
    %cst_10 = arith.constant 1.000000e+00 : f32
    %23 = vector.broadcast %cst_10 : f32 to vector<2x32xf32>
    %24 = arith.addf %23, %22 : vector<2x32xf32>
    %25 = arith.divf %23, %24 : vector<2x32xf32>
    %26 = vector.extract_strided_slice %8 {offsets = [0, 64], sizes = [2, 32], strides = [1, 1]} : vector<2x96xf32> to vector<2x32xf32>
    %27 = vector.extract_strided_slice %9 {offsets = [0, 64], sizes = [2, 32], strides = [1, 1]} : vector<2x96xf32> to vector<2x32xf32>
    %28 = vector.broadcast %4 : vector<1x32xf32> to vector<2x32xf32>
    %29 = arith.addf %27, %28 : vector<2x32xf32>
    %30 = arith.mulf %17, %29 : vector<2x32xf32>
    %31 = arith.addf %26, %30 : vector<2x32xf32>
    %32 = math.tanh %31 : vector<2x32xf32>
    %cst_11 = arith.constant 1.000000e+00 : f32
    %33 = vector.broadcast %cst_11 : f32 to vector<2x32xf32>
    %34 = arith.subf %33, %25 : vector<2x32xf32>
    %35 = arith.mulf %34, %32 : vector<2x32xf32>
    %36 = arith.mulf %25, %5 : vector<2x32xf32>
    %37 = arith.addf %35, %36 : vector<2x32xf32>
    %c0_12 = arith.constant 0 : index
    %c0_13 = arith.constant 0 : index
    %38 = vector.load %arg5[%c0_12, %c0_13] : memref<2x32xf32, #tpu.memory_space<vmem>>, vector<2x32xf32>
    tpu.vector_store %arg5[%c0_12, %c0_13], %37 {strides = array<i32>} : memref<2x32xf32, #tpu.memory_space<vmem>>, vector<2x32xf32>,
    %39 = arith.index_cast %c0_i32_4 : i32 to index
    %c0_14 = arith.constant 0 : index
    %c0_15 = arith.constant 0 : index
    %40 = vector.load %arg4[%39, %c0_14, %c0_15] : memref<8x2x32xf32, #tpu.memory_space<vmem>>, vector<1x2x32xf32>
    %41 = vector.shape_cast %40 : vector<1x2x32xf32> to vector<2x32xf32>
    %42 = vector.shape_cast %37 : vector<2x32xf32> to vector<1x2x32xf32>
    tpu.vector_store %arg4[%39, %c0_14, %c0_15], %42 {strides = array<i32>} : memref<8x2x32xf32, #tpu.memory_space<vmem>>, vector<1x2x32xf32>,
    %c1_i32 = arith.constant 1 : i32
    %c0_16 = arith.constant 0 : index
    %c0_17 = arith.constant 0 : index
    %43 = vector.load %arg5[%c0_16, %c0_17] : memref<2x32xf32, #tpu.memory_space<vmem>>, vector<2x32xf32>
    %44 = arith.index_cast %c1_i32 : i32 to index
    %c0_18 = arith.constant 0 : index
    %c0_19 = arith.constant 0 : index
    %45 = vector.load %arg1[%44, %c0_18, %c0_19] : memref<8x2x96xf32, #tpu.memory_space<vmem>>, vector<1x2x96xf32>
    %46 = vector.shape_cast %45 : vector<1x2x96xf32> to vector<2x96xf32>
    %cst_20 = arith.constant dense<0.000000e+00> : vector<2x96xf32>
    %47 = tpu.matmul %43, %3, %cst_20 {dimension_numbers = #tpu.dot_dimension_numbers<[1], [0], [0], [1], [0, 0, 1, 1], [], []>} : vector<2x32xf32>, vector<32x96xf32>, vector<2x96xf32> -> vector<2x96xf32>
    %48 = vector.extract_strided_slice %46 {offsets = [0, 0], sizes = [2, 32], strides = [1, 1]} : vector<2x96xf32> to vector<2x32xf32>
    %49 = vector.extract_strided_slice %47 {offsets = [0, 0], sizes = [2, 32], strides = [1, 1]} : vector<2x96xf32> to vector<2x32xf32>
    %50 = arith.addf %48, %49 : vector<2x32xf32>
    %51 = arith.negf %50 : vector<2x32xf32>
    %52 = math.exp %51 : vector<2x32xf32>
    %cst_21 = arith.constant 1.000000e+00 : f32
    %53 = vector.broadcast %cst_21 : f32 to vector<2x32xf32>
    %54 = arith.addf %53, %52 : vector<2x32xf32>
    %55 = arith.divf %53, %54 : vector<2x32xf32>
    %56 = vector.extract_strided_slice %46 {offsets = [0, 32], sizes = [2, 32], strides = [1, 1]} : vector<2x96xf32> to vector<2x32xf32>
    %57 = vector.extract_strided_slice %47 {offsets = [0, 32], sizes = [2, 32], strides = [1, 1]} : vector<2x96xf32> to vector<2x32xf32>
    %58 = arith.addf %56, %57 : vector<2x32xf32>
    %59 = arith.negf %58 : vector<2x32xf32>
    %60 = math.exp %59 : vector<2x32xf32>
    %cst_22 = arith.constant 1.000000e+00 : f32
    %61 = vector.broadcast %cst_22 : f32 to vector<2x32xf32>
    %62 = arith.addf %61, %60 : vector<2x32xf32>
    %63 = arith.divf %61, %62 : vector<2x32xf32>
    %64 = vector.extract_strided_slice %46 {offsets = [0, 64], sizes = [2, 32], strides = [1, 1]} : vector<2x96xf32> to vector<2x32xf32>
    %65 = vector.extract_strided_slice %47 {offsets = [0, 64], sizes = [2, 32], strides = [1, 1]} : vector<2x96xf32> to vector<2x32xf32>
    %66 = vector.broadcast %4 : vector<1x32xf32> to vector<2x32xf32>
    %67 = arith.addf %65, %66 : vector<2x32xf32>
    %68 = arith.mulf %55, %67 : vector<2x32xf32>
    %69 = arith.addf %64, %68 : vector<2x32xf32>
    %70 = math.tanh %69 : vector<2x32xf32>
    %cst_23 = arith.constant 1.000000e+00 : f32
    %71 = vector.broadcast %cst_23 : f32 to vector<2x32xf32>
    %72 = arith.subf %71, %63 : vector<2x32xf32>
    %73 = arith.mulf %72, %70 : vector<2x32xf32>
    %74 = arith.mulf %63, %43 : vector<2x32xf32>
    %75 = arith.addf %73, %74 : vector<2x32xf32>
    %c0_24 = arith.constant 0 : index
    %c0_25 = arith.constant 0 : index
    %76 = vector.load %arg5[%c0_24, %c0_25] : memref<2x32xf32, #tpu.memory_space<vmem>>, vector<2x32xf32>
    tpu.vector_store %arg5[%c0_24, %c0_25], %75 {strides = array<i32>} : memref<2x32xf32, #tpu.memory_space<vmem>>, vector<2x32xf32>,
    %77 = arith.index_cast %c1_i32 : i32 to index
    %c0_26 = arith.constant 0 : index
    %c0_27 = arith.constant 0 : index
    %78 = vector.load %arg4[%77, %c0_26, %c0_27] : memref<8x2x32xf32, #tpu.memory_space<vmem>>, vector<1x2x32xf32>
    %79 = vector.shape_cast %78 : vector<1x2x32xf32> to vector<2x32xf32>
    %80 = vector.shape_cast %75 : vector<2x32xf32> to vector<1x2x32xf32>
    tpu.vector_store %arg4[%77, %c0_26, %c0_27], %80 {strides = array<i32>} : memref<8x2x32xf32, #tpu.memory_space<vmem>>, vector<1x2x32xf32>,
    %c2_i32 = arith.constant 2 : i32
    %c0_28 = arith.constant 0 : index
    %c0_29 = arith.constant 0 : index
    %81 = vector.load %arg5[%c0_28, %c0_29] : memref<2x32xf32, #tpu.memory_space<vmem>>, vector<2x32xf32>
    %82 = arith.index_cast %c2_i32 : i32 to index
    %c0_30 = arith.constant 0 : index
    %c0_31 = arith.constant 0 : index
    %83 = vector.load %arg1[%82, %c0_30, %c0_31] : memref<8x2x96xf32, #tpu.memory_space<vmem>>, vector<1x2x96xf32>
    %84 = vector.shape_cast %83 : vector<1x2x96xf32> to vector<2x96xf32>
    %cst_32 = arith.constant dense<0.000000e+00> : vector<2x96xf32>
    %85 = tpu.matmul %81, %3, %cst_32 {dimension_numbers = #tpu.dot_dimension_numbers<[1], [0], [0], [1], [0, 0, 1, 1], [], []>} : vector<2x32xf32>, vector<32x96xf32>, vector<2x96xf32> -> vector<2x96xf32>
    %86 = vector.extract_strided_slice %84 {offsets = [0, 0], sizes = [2, 32], strides = [1, 1]} : vector<2x96xf32> to vector<2x32xf32>
    %87 = vector.extract_strided_slice %85 {offsets = [0, 0], sizes = [2, 32], strides = [1, 1]} : vector<2x96xf32> to vector<2x32xf32>
    %88 = arith.addf %86, %87 : vector<2x32xf32>
    %89 = arith.negf %88 : vector<2x32xf32>
    %90 = math.exp %89 : vector<2x32xf32>
    %cst_33 = arith.constant 1.000000e+00 : f32
    %91 = vector.broadcast %cst_33 : f32 to vector<2x32xf32>
    %92 = arith.addf %91, %90 : vector<2x32xf32>
    %93 = arith.divf %91, %92 : vector<2x32xf32>
    %94 = vector.extract_strided_slice %84 {offsets = [0, 32], sizes = [2, 32], strides = [1, 1]} : vector<2x96xf32> to vector<2x32xf32>
    %95 = vector.extract_strided_slice %85 {offsets = [0, 32], sizes = [2, 32], strides = [1, 1]} : vector<2x96xf32> to vector<2x32xf32>
    %96 = arith.addf %94, %95 : vector<2x32xf32>
    %97 = arith.negf %96 : vector<2x32xf32>
    %98 = math.exp %97 : vector<2x32xf32>
    %cst_34 = arith.constant 1.000000e+00 : f32
    %99 = vector.broadcast %cst_34 : f32 to vector<2x32xf32>
    %100 = arith.addf %99, %98 : vector<2x32xf32>
    %101 = arith.divf %99, %100 : vector<2x32xf32>
    %102 = vector.extract_strided_slice %84 {offsets = [0, 64], sizes = [2, 32], strides = [1, 1]} : vector<2x96xf32> to vector<2x32xf32>
    %103 = vector.extract_strided_slice %85 {offsets = [0, 64], sizes = [2, 32], strides = [1, 1]} : vector<2x96xf32> to vector<2x32xf32>
    %104 = vector.broadcast %4 : vector<1x32xf32> to vector<2x32xf32>
    %105 = arith.addf %103, %104 : vector<2x32xf32>
    %106 = arith.mulf %93, %105 : vector<2x32xf32>
    %107 = arith.addf %102, %106 : vector<2x32xf32>
    %108 = math.tanh %107 : vector<2x32xf32>
    %cst_35 = arith.constant 1.000000e+00 : f32
    %109 = vector.broadcast %cst_35 : f32 to vector<2x32xf32>
    %110 = arith.subf %109, %101 : vector<2x32xf32>
    %111 = arith.mulf %110, %108 : vector<2x32xf32>
    %112 = arith.mulf %101, %81 : vector<2x32xf32>
    %113 = arith.addf %111, %112 : vector<2x32xf32>
    %c0_36 = arith.constant 0 : index
    %c0_37 = arith.constant 0 : index
    %114 = vector.load %arg5[%c0_36, %c0_37] : memref<2x32xf32, #tpu.memory_space<vmem>>, vector<2x32xf32>
    tpu.vector_store %arg5[%c0_36, %c0_37], %113 {strides = array<i32>} : memref<2x32xf32, #tpu.memory_space<vmem>>, vector<2x32xf32>,
    %115 = arith.index_cast %c2_i32 : i32 to index
    %c0_38 = arith.constant 0 : index
    %c0_39 = arith.constant 0 : index
    %116 = vector.load %arg4[%115, %c0_38, %c0_39] : memref<8x2x32xf32, #tpu.memory_space<vmem>>, vector<1x2x32xf32>
    %117 = vector.shape_cast %116 : vector<1x2x32xf32> to vector<2x32xf32>
    %118 = vector.shape_cast %113 : vector<2x32xf32> to vector<1x2x32xf32>
    tpu.vector_store %arg4[%115, %c0_38, %c0_39], %118 {strides = array<i32>} : memref<8x2x32xf32, #tpu.memory_space<vmem>>, vector<1x2x32xf32>,
    %c3_i32 = arith.constant 3 : i32
    %c0_40 = arith.constant 0 : index
    %c0_41 = arith.constant 0 : index
    %119 = vector.load %arg5[%c0_40, %c0_41] : memref<2x32xf32, #tpu.memory_space<vmem>>, vector<2x32xf32>
    %120 = arith.index_cast %c3_i32 : i32 to index
    %c0_42 = arith.constant 0 : index
    %c0_43 = arith.constant 0 : index
    %121 = vector.load %arg1[%120, %c0_42, %c0_43] : memref<8x2x96xf32, #tpu.memory_space<vmem>>, vector<1x2x96xf32>
    %122 = vector.shape_cast %121 : vector<1x2x96xf32> to vector<2x96xf32>
    %cst_44 = arith.constant dense<0.000000e+00> : vector<2x96xf32>
    %123 = tpu.matmul %119, %3, %cst_44 {dimension_numbers = #tpu.dot_dimension_numbers<[1], [0], [0], [1], [0, 0, 1, 1], [], []>} : vector<2x32xf32>, vector<32x96xf32>, vector<2x96xf32> -> vector<2x96xf32>
    %124 = vector.extract_strided_slice %122 {offsets = [0, 0], sizes = [2, 32], strides = [1, 1]} : vector<2x96xf32> to vector<2x32xf32>
    %125 = vector.extract_strided_slice %123 {offsets = [0, 0], sizes = [2, 32], strides = [1, 1]} : vector<2x96xf32> to vector<2x32xf32>
    %126 = arith.addf %124, %125 : vector<2x32xf32>
    %127 = arith.negf %126 : vector<2x32xf32>
    %128 = math.exp %127 : vector<2x32xf32>
    %cst_45 = arith.constant 1.000000e+00 : f32
    %129 = vector.broadcast %cst_45 : f32 to vector<2x32xf32>
    %130 = arith.addf %129, %128 : vector<2x32xf32>
    %131 = arith.divf %129, %130 : vector<2x32xf32>
    %132 = vector.extract_strided_slice %122 {offsets = [0, 32], sizes = [2, 32], strides = [1, 1]} : vector<2x96xf32> to vector<2x32xf32>
    %133 = vector.extract_strided_slice %123 {offsets = [0, 32], sizes = [2, 32], strides = [1, 1]} : vector<2x96xf32> to vector<2x32xf32>
    %134 = arith.addf %132, %133 : vector<2x32xf32>
    %135 = arith.negf %134 : vector<2x32xf32>
    %136 = math.exp %135 : vector<2x32xf32>
    %cst_46 = arith.constant 1.000000e+00 : f32
    %137 = vector.broadcast %cst_46 : f32 to vector<2x32xf32>
    %138 = arith.addf %137, %136 : vector<2x32xf32>
    %139 = arith.divf %137, %138 : vector<2x32xf32>
    %140 = vector.extract_strided_slice %122 {offsets = [0, 64], sizes = [2, 32], strides = [1, 1]} : vector<2x96xf32> to vector<2x32xf32>
    %141 = vector.extract_strided_slice %123 {offsets = [0, 64], sizes = [2, 32], strides = [1, 1]} : vector<2x96xf32> to vector<2x32xf32>
    %142 = vector.broadcast %4 : vector<1x32xf32> to vector<2x32xf32>
    %143 = arith.addf %141, %142 : vector<2x32xf32>
    %144 = arith.mulf %131, %143 : vector<2x32xf32>
    %145 = arith.addf %140, %144 : vector<2x32xf32>
    %146 = math.tanh %145 : vector<2x32xf32>
    %cst_47 = arith.constant 1.000000e+00 : f32
    %147 = vector.broadcast %cst_47 : f32 to vector<2x32xf32>
    %148 = arith.subf %147, %139 : vector<2x32xf32>
    %149 = arith.mulf %148, %146 : vector<2x32xf32>
    %150 = arith.mulf %139, %119 : vector<2x32xf32>
    %151 = arith.addf %149, %150 : vector<2x32xf32>
    %c0_48 = arith.constant 0 : index
    %c0_49 = arith.constant 0 : index
    %152 = vector.load %arg5[%c0_48, %c0_49] : memref<2x32xf32, #tpu.memory_space<vmem>>, vector<2x32xf32>
    tpu.vector_store %arg5[%c0_48, %c0_49], %151 {strides = array<i32>} : memref<2x32xf32, #tpu.memory_space<vmem>>, vector<2x32xf32>,
    %153 = arith.index_cast %c3_i32 : i32 to index
    %c0_50 = arith.constant 0 : index
    %c0_51 = arith.constant 0 : index
    %154 = vector.load %arg4[%153, %c0_50, %c0_51] : memref<8x2x32xf32, #tpu.memory_space<vmem>>, vector<1x2x32xf32>
    %155 = vector.shape_cast %154 : vector<1x2x32xf32> to vector<2x32xf32>
    %156 = vector.shape_cast %151 : vector<2x32xf32> to vector<1x2x32xf32>
    tpu.vector_store %arg4[%153, %c0_50, %c0_51], %156 {strides = array<i32>} : memref<8x2x32xf32, #tpu.memory_space<vmem>>, vector<1x2x32xf32>,
    %c4_i32 = arith.constant 4 : i32
    %c0_52 = arith.constant 0 : index
    %c0_53 = arith.constant 0 : index
    %157 = vector.load %arg5[%c0_52, %c0_53] : memref<2x32xf32, #tpu.memory_space<vmem>>, vector<2x32xf32>
    %158 = arith.index_cast %c4_i32 : i32 to index
    %c0_54 = arith.constant 0 : index
    %c0_55 = arith.constant 0 : index
    %159 = vector.load %arg1[%158, %c0_54, %c0_55] : memref<8x2x96xf32, #tpu.memory_space<vmem>>, vector<1x2x96xf32>
    %160 = vector.shape_cast %159 : vector<1x2x96xf32> to vector<2x96xf32>
    %cst_56 = arith.constant dense<0.000000e+00> : vector<2x96xf32>
    %161 = tpu.matmul %157, %3, %cst_56 {dimension_numbers = #tpu.dot_dimension_numbers<[1], [0], [0], [1], [0, 0, 1, 1], [], []>} : vector<2x32xf32>, vector<32x96xf32>, vector<2x96xf32> -> vector<2x96xf32>
    %162 = vector.extract_strided_slice %160 {offsets = [0, 0], sizes = [2, 32], strides = [1, 1]} : vector<2x96xf32> to vector<2x32xf32>
    %163 = vector.extract_strided_slice %161 {offsets = [0, 0], sizes = [2, 32], strides = [1, 1]} : vector<2x96xf32> to vector<2x32xf32>
    %164 = arith.addf %162, %163 : vector<2x32xf32>
    %165 = arith.negf %164 : vector<2x32xf32>
    %166 = math.exp %165 : vector<2x32xf32>
    %cst_57 = arith.constant 1.000000e+00 : f32
    %167 = vector.broadcast %cst_57 : f32 to vector<2x32xf32>
    %168 = arith.addf %167, %166 : vector<2x32xf32>
    %169 = arith.divf %167, %168 : vector<2x32xf32>
    %170 = vector.extract_strided_slice %160 {offsets = [0, 32], sizes = [2, 32], strides = [1, 1]} : vector<2x96xf32> to vector<2x32xf32>
    %171 = vector.extract_strided_slice %161 {offsets = [0, 32], sizes = [2, 32], strides = [1, 1]} : vector<2x96xf32> to vector<2x32xf32>
    %172 = arith.addf %170, %171 : vector<2x32xf32>
    %173 = arith.negf %172 : vector<2x32xf32>
    %174 = math.exp %173 : vector<2x32xf32>
    %cst_58 = arith.constant 1.000000e+00 : f32
    %175 = vector.broadcast %cst_58 : f32 to vector<2x32xf32>
    %176 = arith.addf %175, %174 : vector<2x32xf32>
    %177 = arith.divf %175, %176 : vector<2x32xf32>
    %178 = vector.extract_strided_slice %160 {offsets = [0, 64], sizes = [2, 32], strides = [1, 1]} : vector<2x96xf32> to vector<2x32xf32>
    %179 = vector.extract_strided_slice %161 {offsets = [0, 64], sizes = [2, 32], strides = [1, 1]} : vector<2x96xf32> to vector<2x32xf32>
    %180 = vector.broadcast %4 : vector<1x32xf32> to vector<2x32xf32>
    %181 = arith.addf %179, %180 : vector<2x32xf32>
    %182 = arith.mulf %169, %181 : vector<2x32xf32>
    %183 = arith.addf %178, %182 : vector<2x32xf32>
    %184 = math.tanh %183 : vector<2x32xf32>
    %cst_59 = arith.constant 1.000000e+00 : f32
    %185 = vector.broadcast %cst_59 : f32 to vector<2x32xf32>
    %186 = arith.subf %185, %177 : vector<2x32xf32>
    %187 = arith.mulf %186, %184 : vector<2x32xf32>
    %188 = arith.mulf %177, %157 : vector<2x32xf32>
    %189 = arith.addf %187, %188 : vector<2x32xf32>
    %c0_60 = arith.constant 0 : index
    %c0_61 = arith.constant 0 : index
    %190 = vector.load %arg5[%c0_60, %c0_61] : memref<2x32xf32, #tpu.memory_space<vmem>>, vector<2x32xf32>
    tpu.vector_store %arg5[%c0_60, %c0_61], %189 {strides = array<i32>} : memref<2x32xf32, #tpu.memory_space<vmem>>, vector<2x32xf32>,
    %191 = arith.index_cast %c4_i32 : i32 to index
    %c0_62 = arith.constant 0 : index
    %c0_63 = arith.constant 0 : index
    %192 = vector.load %arg4[%191, %c0_62, %c0_63] : memref<8x2x32xf32, #tpu.memory_space<vmem>>, vector<1x2x32xf32>
    %193 = vector.shape_cast %192 : vector<1x2x32xf32> to vector<2x32xf32>
    %194 = vector.shape_cast %189 : vector<2x32xf32> to vector<1x2x32xf32>
    tpu.vector_store %arg4[%191, %c0_62, %c0_63], %194 {strides = array<i32>} : memref<8x2x32xf32, #tpu.memory_space<vmem>>, vector<1x2x32xf32>,
    %c5_i32 = arith.constant 5 : i32
    %c0_64 = arith.constant 0 : index
    %c0_65 = arith.constant 0 : index
    %195 = vector.load %arg5[%c0_64, %c0_65] : memref<2x32xf32, #tpu.memory_space<vmem>>, vector<2x32xf32>
    %196 = arith.index_cast %c5_i32 : i32 to index
    %c0_66 = arith.constant 0 : index
    %c0_67 = arith.constant 0 : index
    %197 = vector.load %arg1[%196, %c0_66, %c0_67] : memref<8x2x96xf32, #tpu.memory_space<vmem>>, vector<1x2x96xf32>
    %198 = vector.shape_cast %197 : vector<1x2x96xf32> to vector<2x96xf32>
    %cst_68 = arith.constant dense<0.000000e+00> : vector<2x96xf32>
    %199 = tpu.matmul %195, %3, %cst_68 {dimension_numbers = #tpu.dot_dimension_numbers<[1], [0], [0], [1], [0, 0, 1, 1], [], []>} : vector<2x32xf32>, vector<32x96xf32>, vector<2x96xf32> -> vector<2x96xf32>
    %200 = vector.extract_strided_slice %198 {offsets = [0, 0], sizes = [2, 32], strides = [1, 1]} : vector<2x96xf32> to vector<2x32xf32>
    %201 = vector.extract_strided_slice %199 {offsets = [0, 0], sizes = [2, 32], strides = [1, 1]} : vector<2x96xf32> to vector<2x32xf32>
    %202 = arith.addf %200, %201 : vector<2x32xf32>
    %203 = arith.negf %202 : vector<2x32xf32>
    %204 = math.exp %203 : vector<2x32xf32>
    %cst_69 = arith.constant 1.000000e+00 : f32
    %205 = vector.broadcast %cst_69 : f32 to vector<2x32xf32>
    %206 = arith.addf %205, %204 : vector<2x32xf32>
    %207 = arith.divf %205, %206 : vector<2x32xf32>
    %208 = vector.extract_strided_slice %198 {offsets = [0, 32], sizes = [2, 32], strides = [1, 1]} : vector<2x96xf32> to vector<2x32xf32>
    %209 = vector.extract_strided_slice %199 {offsets = [0, 32], sizes = [2, 32], strides = [1, 1]} : vector<2x96xf32> to vector<2x32xf32>
    %210 = arith.addf %208, %209 : vector<2x32xf32>
    %211 = arith.negf %210 : vector<2x32xf32>
    %212 = math.exp %211 : vector<2x32xf32>
    %cst_70 = arith.constant 1.000000e+00 : f32
    %213 = vector.broadcast %cst_70 : f32 to vector<2x32xf32>
    %214 = arith.addf %213, %212 : vector<2x32xf32>
    %215 = arith.divf %213, %214 : vector<2x32xf32>
    %216 = vector.extract_strided_slice %198 {offsets = [0, 64], sizes = [2, 32], strides = [1, 1]} : vector<2x96xf32> to vector<2x32xf32>
    %217 = vector.extract_strided_slice %199 {offsets = [0, 64], sizes = [2, 32], strides = [1, 1]} : vector<2x96xf32> to vector<2x32xf32>
    %218 = vector.broadcast %4 : vector<1x32xf32> to vector<2x32xf32>
    %219 = arith.addf %217, %218 : vector<2x32xf32>
    %220 = arith.mulf %207, %219 : vector<2x32xf32>
    %221 = arith.addf %216, %220 : vector<2x32xf32>
    %222 = math.tanh %221 : vector<2x32xf32>
    %cst_71 = arith.constant 1.000000e+00 : f32
    %223 = vector.broadcast %cst_71 : f32 to vector<2x32xf32>
    %224 = arith.subf %223, %215 : vector<2x32xf32>
    %225 = arith.mulf %224, %222 : vector<2x32xf32>
    %226 = arith.mulf %215, %195 : vector<2x32xf32>
    %227 = arith.addf %225, %226 : vector<2x32xf32>
    %c0_72 = arith.constant 0 : index
    %c0_73 = arith.constant 0 : index
    %228 = vector.load %arg5[%c0_72, %c0_73] : memref<2x32xf32, #tpu.memory_space<vmem>>, vector<2x32xf32>
    tpu.vector_store %arg5[%c0_72, %c0_73], %227 {strides = array<i32>} : memref<2x32xf32, #tpu.memory_space<vmem>>, vector<2x32xf32>,
    %229 = arith.index_cast %c5_i32 : i32 to index
    %c0_74 = arith.constant 0 : index
    %c0_75 = arith.constant 0 : index
    %230 = vector.load %arg4[%229, %c0_74, %c0_75] : memref<8x2x32xf32, #tpu.memory_space<vmem>>, vector<1x2x32xf32>
    %231 = vector.shape_cast %230 : vector<1x2x32xf32> to vector<2x32xf32>
    %232 = vector.shape_cast %227 : vector<2x32xf32> to vector<1x2x32xf32>
    tpu.vector_store %arg4[%229, %c0_74, %c0_75], %232 {strides = array<i32>} : memref<8x2x32xf32, #tpu.memory_space<vmem>>, vector<1x2x32xf32>,
    %c6_i32 = arith.constant 6 : i32
    %c0_76 = arith.constant 0 : index
    %c0_77 = arith.constant 0 : index
    %233 = vector.load %arg5[%c0_76, %c0_77] : memref<2x32xf32, #tpu.memory_space<vmem>>, vector<2x32xf32>
    %234 = arith.index_cast %c6_i32 : i32 to index
    %c0_78 = arith.constant 0 : index
    %c0_79 = arith.constant 0 : index
    %235 = vector.load %arg1[%234, %c0_78, %c0_79] : memref<8x2x96xf32, #tpu.memory_space<vmem>>, vector<1x2x96xf32>
    %236 = vector.shape_cast %235 : vector<1x2x96xf32> to vector<2x96xf32>
    %cst_80 = arith.constant dense<0.000000e+00> : vector<2x96xf32>
    %237 = tpu.matmul %233, %3, %cst_80 {dimension_numbers = #tpu.dot_dimension_numbers<[1], [0], [0], [1], [0, 0, 1, 1], [], []>} : vector<2x32xf32>, vector<32x96xf32>, vector<2x96xf32> -> vector<2x96xf32>
    %238 = vector.extract_strided_slice %236 {offsets = [0, 0], sizes = [2, 32], strides = [1, 1]} : vector<2x96xf32> to vector<2x32xf32>
    %239 = vector.extract_strided_slice %237 {offsets = [0, 0], sizes = [2, 32], strides = [1, 1]} : vector<2x96xf32> to vector<2x32xf32>
    %240 = arith.addf %238, %239 : vector<2x32xf32>
    %241 = arith.negf %240 : vector<2x32xf32>
    %242 = math.exp %241 : vector<2x32xf32>
    %cst_81 = arith.constant 1.000000e+00 : f32
    %243 = vector.broadcast %cst_81 : f32 to vector<2x32xf32>
    %244 = arith.addf %243, %242 : vector<2x32xf32>
    %245 = arith.divf %243, %244 : vector<2x32xf32>
    %246 = vector.extract_strided_slice %236 {offsets = [0, 32], sizes = [2, 32], strides = [1, 1]} : vector<2x96xf32> to vector<2x32xf32>
    %247 = vector.extract_strided_slice %237 {offsets = [0, 32], sizes = [2, 32], strides = [1, 1]} : vector<2x96xf32> to vector<2x32xf32>
    %248 = arith.addf %246, %247 : vector<2x32xf32>
    %249 = arith.negf %248 : vector<2x32xf32>
    %250 = math.exp %249 : vector<2x32xf32>
    %cst_82 = arith.constant 1.000000e+00 : f32
    %251 = vector.broadcast %cst_82 : f32 to vector<2x32xf32>
    %252 = arith.addf %251, %250 : vector<2x32xf32>
    %253 = arith.divf %251, %252 : vector<2x32xf32>
    %254 = vector.extract_strided_slice %236 {offsets = [0, 64], sizes = [2, 32], strides = [1, 1]} : vector<2x96xf32> to vector<2x32xf32>
    %255 = vector.extract_strided_slice %237 {offsets = [0, 64], sizes = [2, 32], strides = [1, 1]} : vector<2x96xf32> to vector<2x32xf32>
    %256 = vector.broadcast %4 : vector<1x32xf32> to vector<2x32xf32>
    %257 = arith.addf %255, %256 : vector<2x32xf32>
    %258 = arith.mulf %245, %257 : vector<2x32xf32>
    %259 = arith.addf %254, %258 : vector<2x32xf32>
    %260 = math.tanh %259 : vector<2x32xf32>
    %cst_83 = arith.constant 1.000000e+00 : f32
    %261 = vector.broadcast %cst_83 : f32 to vector<2x32xf32>
    %262 = arith.subf %261, %253 : vector<2x32xf32>
    %263 = arith.mulf %262, %260 : vector<2x32xf32>
    %264 = arith.mulf %253, %233 : vector<2x32xf32>
    %265 = arith.addf %263, %264 : vector<2x32xf32>
    %c0_84 = arith.constant 0 : index
    %c0_85 = arith.constant 0 : index
    %266 = vector.load %arg5[%c0_84, %c0_85] : memref<2x32xf32, #tpu.memory_space<vmem>>, vector<2x32xf32>
    tpu.vector_store %arg5[%c0_84, %c0_85], %265 {strides = array<i32>} : memref<2x32xf32, #tpu.memory_space<vmem>>, vector<2x32xf32>,
    %267 = arith.index_cast %c6_i32 : i32 to index
    %c0_86 = arith.constant 0 : index
    %c0_87 = arith.constant 0 : index
    %268 = vector.load %arg4[%267, %c0_86, %c0_87] : memref<8x2x32xf32, #tpu.memory_space<vmem>>, vector<1x2x32xf32>
    %269 = vector.shape_cast %268 : vector<1x2x32xf32> to vector<2x32xf32>
    %270 = vector.shape_cast %265 : vector<2x32xf32> to vector<1x2x32xf32>
    tpu.vector_store %arg4[%267, %c0_86, %c0_87], %270 {strides = array<i32>} : memref<8x2x32xf32, #tpu.memory_space<vmem>>, vector<1x2x32xf32>,
    %c7_i32 = arith.constant 7 : i32
    %c0_88 = arith.constant 0 : index
    %c0_89 = arith.constant 0 : index
    %271 = vector.load %arg5[%c0_88, %c0_89] : memref<2x32xf32, #tpu.memory_space<vmem>>, vector<2x32xf32>
    %272 = arith.index_cast %c7_i32 : i32 to index
    %c0_90 = arith.constant 0 : index
    %c0_91 = arith.constant 0 : index
    %273 = vector.load %arg1[%272, %c0_90, %c0_91] : memref<8x2x96xf32, #tpu.memory_space<vmem>>, vector<1x2x96xf32>
    %274 = vector.shape_cast %273 : vector<1x2x96xf32> to vector<2x96xf32>
    %cst_92 = arith.constant dense<0.000000e+00> : vector<2x96xf32>
    %275 = tpu.matmul %271, %3, %cst_92 {dimension_numbers = #tpu.dot_dimension_numbers<[1], [0], [0], [1], [0, 0, 1, 1], [], []>} : vector<2x32xf32>, vector<32x96xf32>, vector<2x96xf32> -> vector<2x96xf32>
    %276 = vector.extract_strided_slice %274 {offsets = [0, 0], sizes = [2, 32], strides = [1, 1]} : vector<2x96xf32> to vector<2x32xf32>
    %277 = vector.extract_strided_slice %275 {offsets = [0, 0], sizes = [2, 32], strides = [1, 1]} : vector<2x96xf32> to vector<2x32xf32>
    %278 = arith.addf %276, %277 : vector<2x32xf32>
    %279 = arith.negf %278 : vector<2x32xf32>
    %280 = math.exp %279 : vector<2x32xf32>
    %cst_93 = arith.constant 1.000000e+00 : f32
    %281 = vector.broadcast %cst_93 : f32 to vector<2x32xf32>
    %282 = arith.addf %281, %280 : vector<2x32xf32>
    %283 = arith.divf %281, %282 : vector<2x32xf32>
    %284 = vector.extract_strided_slice %274 {offsets = [0, 32], sizes = [2, 32], strides = [1, 1]} : vector<2x96xf32> to vector<2x32xf32>
    %285 = vector.extract_strided_slice %275 {offsets = [0, 32], sizes = [2, 32], strides = [1, 1]} : vector<2x96xf32> to vector<2x32xf32>
    %286 = arith.addf %284, %285 : vector<2x32xf32>
    %287 = arith.negf %286 : vector<2x32xf32>
    %288 = math.exp %287 : vector<2x32xf32>
    %cst_94 = arith.constant 1.000000e+00 : f32
    %289 = vector.broadcast %cst_94 : f32 to vector<2x32xf32>
    %290 = arith.addf %289, %288 : vector<2x32xf32>
    %291 = arith.divf %289, %290 : vector<2x32xf32>
    %292 = vector.extract_strided_slice %274 {offsets = [0, 64], sizes = [2, 32], strides = [1, 1]} : vector<2x96xf32> to vector<2x32xf32>
    %293 = vector.extract_strided_slice %275 {offsets = [0, 64], sizes = [2, 32], strides = [1, 1]} : vector<2x96xf32> to vector<2x32xf32>
    %294 = vector.broadcast %4 : vector<1x32xf32> to vector<2x32xf32>
    %295 = arith.addf %293, %294 : vector<2x32xf32>
    %296 = arith.mulf %283, %295 : vector<2x32xf32>
    %297 = arith.addf %292, %296 : vector<2x32xf32>
    %298 = math.tanh %297 : vector<2x32xf32>
    %cst_95 = arith.constant 1.000000e+00 : f32
    %299 = vector.broadcast %cst_95 : f32 to vector<2x32xf32>
    %300 = arith.subf %299, %291 : vector<2x32xf32>
    %301 = arith.mulf %300, %298 : vector<2x32xf32>
    %302 = arith.mulf %291, %271 : vector<2x32xf32>
    %303 = arith.addf %301, %302 : vector<2x32xf32>
    %c0_96 = arith.constant 0 : index
    %c0_97 = arith.constant 0 : index
    %304 = vector.load %arg5[%c0_96, %c0_97] : memref<2x32xf32, #tpu.memory_space<vmem>>, vector<2x32xf32>
    tpu.vector_store %arg5[%c0_96, %c0_97], %303 {strides = array<i32>} : memref<2x32xf32, #tpu.memory_space<vmem>>, vector<2x32xf32>,
    %305 = arith.index_cast %c7_i32 : i32 to index
    %c0_98 = arith.constant 0 : index
    %c0_99 = arith.constant 0 : index
    %306 = vector.load %arg4[%305, %c0_98, %c0_99] : memref<8x2x32xf32, #tpu.memory_space<vmem>>, vector<1x2x32xf32>
    %307 = vector.shape_cast %306 : vector<1x2x32xf32> to vector<2x32xf32>
    %308 = vector.shape_cast %303 : vector<2x32xf32> to vector<1x2x32xf32>
    tpu.vector_store %arg4[%305, %c0_98, %c0_99], %308 {strides = array<i32>} : memref<8x2x32xf32, #tpu.memory_space<vmem>>, vector<1x2x32xf32>,
    %c8_i32 = arith.constant 8 : i32
    return
  }
  func.func @transform_0(%arg0: i32) -> (i32, i32, i32) {
    %c0_i32 = arith.constant 0 : i32
    %c0_i32_0 = arith.constant 0 : i32
    %c0_i32_1 = arith.constant 0 : i32
    return %arg0, %c0_i32, %c0_i32_0 : i32, i32, i32
  }
  func.func @transform_1(%arg0: i32) -> (i32, i32) {
    %c0_i32 = arith.constant 0 : i32
    %c0_i32_0 = arith.constant 0 : i32
    %c0_i32_1 = arith.constant 0 : i32
    return %c0_i32, %c0_i32_0 : i32, i32
  }
  func.func @transform_2(%arg0: i32) -> (i32, i32) {
    %c0_i32 = arith.constant 0 : i32
    %c0_i32_0 = arith.constant 0 : i32
    %c0_i32_1 = arith.constant 0 : i32
    return %c0_i32, %c0_i32_0 : i32, i32
  }
  func.func @transform_3(%arg0: i32) -> (i32, i32, i32) {
    %c0_i32 = arith.constant 0 : i32
    %c0_i32_0 = arith.constant 0 : i32
    %c0_i32_1 = arith.constant 0 : i32
    return %arg0, %c0_i32, %c0_i32_0 : i32, i32, i32
  }
}

</mosaic_0001>

<llo_original>
// kernel: tpu_custom_call.1
$region0: #{tpu_custom_call.1}
  #allocation0 [shape = 'u32[]', space=smem, size = 0x4, offset = 0x4, fixed_abs, tag = 'smem constant byte address 0x4 - core index']
  #allocation1 [shape = 'u32[72,128]{1,0:T(1,128)}', space=vmem, size = 0x9000, scoped, tag = 'internal scratch']
  #allocation2 [shape = 'f32[2,32]{1,0:T(2,128)}', space=vmem, size = 0x400, scoped, tag = 'scratch operand']
  %s0 = inlined_call_operand.hbm [shape: f32[8,2,96], index: 0, kind: input, shape index: {}]
  %s1 = inlined_call_operand.hbm [shape: f32[32,96], index: 1, kind: input, shape index: {}]
  %s2 = inlined_call_operand.vmem [shape: f32[1,32], index: 2, kind: input, shape index: {}]
  %s3 = inlined_call_operand.hbm [shape: f32[8,2,32], index: 3, kind: output, shape index: {}]
  %s4 = sld [smem:[#allocation0]]
  $region34: #{tpu_custom_call.1} parent=0
    _
  %s6 = ssub.s32 1, %s4
  %s7 = scalar_select 0, %s6, %s4
  $region1: #{tpu_custom_call.1} parent=0
    #allocation3 [shape = 'u8[8192]{0}', space=vmem, size = 0x2000, scoped, tag = 'input window, operand 0, single buffered']
    #allocation4 [shape = 's32[1]{0}', space=sflag, size = 0x4, scoped, tag = 'scoped memory for tpu_custom_call.1']
    #allocation5 [shape = 's32[1]{0}', space=sflag, size = 0x4, scoped, tag = 'scoped memory for tpu_custom_call.1']
    #allocation6 [shape = 'u8[16384]{0}', space=vmem, size = 0x4000, scoped, tag = 'input window, operand 1, single buffered']
    #allocation7 [shape = 's32[1]{0}', space=sflag, size = 0x4, scoped, tag = 'scoped memory for tpu_custom_call.1']
    #allocation8 [shape = 'u8[8192]{0}', space=vmem, size = 0x2000, scoped, tag = 'output window, operand 0, single buffered']
    %8 = vsyncpa [#allocation4], 0
    %9 = vsyncpa [#allocation7], 0
    %10 = vsyncpa [#allocation5], 0
    // Predicated region
    $region2: #{tpu_custom_call.1} parent=1 // pred_check
      _
    $region3: #{tpu_custom_call.1} parent=1 // pred_check_branch
      %12 = sbr.rel (0) target = $region5
    $region4: #{tpu_custom_call.1} parent=1 // pred_region
      %14 = vsyncadd [#allocation4], 0
      %s15 = sshll.u32 %s0, 4
      %s16 = int_to_ptr.hbm [resolvable:$true] %s15
      %s17 = sshll.u32 [#allocation3], 4
      %s18 = int_to_ptr.vmem [resolvable:$true] %s17
      %23 = dma.hbm_to_vmem [thread:$0]  %s16, 256, %s18, [#allocation4], 32, 32, 2
    $region5: #{tpu_custom_call.1} parent=1 // pred_fallthru
      _
    // Predicated region
    $region6: #{tpu_custom_call.1} parent=1 // pred_check
      _
    $region7: #{tpu_custom_call.1} parent=1 // pred_check_branch
      %25 = sbr.rel (0) target = $region9
    $region8: #{tpu_custom_call.1} parent=1 // pred_region
      %27 = vsyncadd [#allocation7], 0
      %s28 = sshll.u32 %s1, 4
      %s29 = int_to_ptr.hbm [resolvable:$true] %s28
      %s30 = sshll.u32 [#allocation6], 4
      %s31 = int_to_ptr.vmem [resolvable:$true] %s30
      %36 = dma.hbm_to_vmem [thread:$0]  %s29, 512, %s31, [#allocation7], 128, 128, 8
    $region9: #{tpu_custom_call.1} parent=1 // pred_fallthru
      _
    // Predicated region
    $region10: #{tpu_custom_call.1} parent=1 // pred_check
      _
    $region11: #{tpu_custom_call.1} parent=1 // pred_check_branch
      %38 = sbr.rel (0) target = $region13
    $region12: #{tpu_custom_call.1} parent=1 // pred_region
      _
    $region13: #{tpu_custom_call.1} parent=1 // pred_fallthru
      _
    // Predicated region
    $region14: #{tpu_custom_call.1} parent=1 // pred_check
      _
    $region15: #{tpu_custom_call.1} parent=1 // pred_check_branch
      %40 = sbr.rel (0) target = $region17
    $region16: #{tpu_custom_call.1} parent=1 // pred_region
      %42 = dma.done [#allocation4], 256
    $region17: #{tpu_custom_call.1} parent=1 // pred_fallthru
      _
    // Predicated region
    $region18: #{tpu_custom_call.1} parent=1 // pred_check
      _
    $region19: #{tpu_custom_call.1} parent=1 // pred_check_branch
      %44 = sbr.rel (0) target = $region21
    $region20: #{tpu_custom_call.1} parent=1 // pred_region
      %46 = dma.done [#allocation7], 512
    $region21: #{tpu_custom_call.1} parent=1 // pred_fallthru
      _
    %p47 = scmp.eq.s32.totalorder 0, 0
    // Predicated region
    $region22: #{tpu_custom_call.1} parent=1 // pred_check
      %p48 = pneg %p47
    $region23: #{tpu_custom_call.1} parent=1 // pred_check_branch
      %50 = sbr.rel (%p48) target = $region25
    $region24: #{tpu_custom_call.1} parent=1 // pred_region
      %vm51 = vcmask 254976
      %52 = vst.msk [vmem:[#allocation2] sm:$0x3] %vm51, 0.0
    $region25: #{tpu_custom_call.1} parent=1 // pred_fallthru
      _
    %v53 = vld [vmem:[#allocation6] sm:$0xff]
    %v54 = vld [vmem:[#allocation6 + $0x8] sm:$0xff]
    %v55 = vld [vmem:[#allocation6 + $0x10] sm:$0xff]
    %v56 = vld [vmem:[#allocation6 + $0x18] sm:$0xff]
    %v57 = vld [vmem:[%s2] sm:$0x1]
    %v58 = vld [vmem:[#allocation2] sm:$0x3]
    %v59 = vld [vmem:[#allocation3] sm:$0x3]
    %vm60 = vcmask 261120
    %v62 = vsel %vm60, %v58, 0
    %64 = vmatpush.msra.mxu0 0.0
    %65 = vmatpush.msra.mxu0 0.0
    %66 = vmatpush.msra.mxu0 0.0
    %67 = vmatpush.msra.mxu0 0.0
    %68 = vmatpush.msra.mxu0 0.0
    %69 = vmatpush.msra.mxu0 0.0
    %70 = vmatpush.msra.mxu0 0.0
    %71 = vmatpush.msra.mxu0 0.0
    %72 = vmatpush.msra.mxu0 0.0
    %73 = vmatpush.msra.mxu0 0.0
    %74 = vmatpush.msra.mxu0 0.0
    %75 = vmatpush.msra.mxu0 0.0
    %76 = vmatpush.msra.mxu0 %v56
    %77 = vmatpush.msra.mxu0 %v55
    %78 = vmatpush.msra.mxu0 %v54
    %79 = vmatpush.msra.mxu0 %v53
    %80 = vmatmul.f32.gmra.mxu0 %v62
    %v81 = vpop.f32.mrf.mxu0
    %v82 = vadd.f32 0.0, %v81
    %83 = vdwg.mxu0
    %v84 = vadd.f32 %v59, %v82
    %v85 = vxor.u32 %v84, 2147483648
    %v86 = vmul.f32 %v85, 1.442695
    %v87 = vpow.pop %v86
    %v88 = vadd.f32 %v87, 1.0
    %v89 = vrcp.pop %v88
    %v90 = vmul.f32 %v88, %v89
    %v91 = vsub.f32 1.0, %v90
    %v92 = vmul.f32 %v89, %v91
    %v93 = vadd.f32 %v89, %v92
    %vm94 = vweird.f32 %v88
    %vm95 = vweird.f32 %v89
    %vm96 = vmor %vm94, %vm95
    %v97 = vsel %vm96, %v89, %v93
    %v98 = vand.u32 2147483647, %v88
    %vm99 = vcmp.eq.f32.partialorder %v98, 8.507059e+37
    %v100 = vand.u32 %v88, 2147483648
    %v101 = vor.u32 1.1754944e-38, %v100
    %v102 = vsel %vm99, %v101, %v97
    %v103 = vmul.f32 1.0, %v102
    %v105 = vperm.slane %v57, 0
    %106 = vrot.lane.b32.xlu0 %v105, 64
    %v107 = vpop.permute.xlu0 %106
    %v109 = vadd.f32 %v82, %v107
    %111 = vrot.lane.b32.xlu0 %v109, 64
    %v112 = vpop.permute.xlu0 %111
    %v114 = vmul.f32 %v103, %v112
    %116 = vrot.lane.b32.xlu0 %v114, 64
    %v117 = vpop.permute.xlu0 %116
    %v119 = vadd.f32 %v59, %v117
    %v120 = vtanh.pop %v119
    %v121 = vsub.f32 1.0, %v103
    %123 = vrot.lane.b32.xlu0 %v120, 96
    %v124 = vpop.permute.xlu0 %123
    %v126 = vmul.f32 %v121, %v124
    %127 = vrot.lane.b32.xlu0 %v58, 32
    %v128 = vpop.permute.xlu0 %127
    %v130 = vmul.f32 %v103, %v128
    %v131 = vadd.f32 %v126, %v130
    %133 = vrot.lane.b32.xlu0 %v131, 96
    %v134 = vpop.permute.xlu0 %133
    %vm136 = vcmask 254976
    %137 = vst.msk [vmem:[#allocation2] sm:$0x3] %vm136, %v134
    %138 = vst.msk [vmem:[#allocation8] sm:$0x3] %vm136, %v134
    %v139 = vld [vmem:[#allocation2] sm:$0x3]
    %s140 = scalar_lea.vmem [#allocation3], 2
    %v141 = vld [vmem:[%s140] sm:$0x3]
    %v143 = vsel %vm60, %v139, 0
    %145 = vmatpush.msra.mxu0 0.0
    %146 = vmatpush.msra.mxu0 0.0
    %147 = vmatpush.msra.mxu0 0.0
    %148 = vmatpush.msra.mxu0 0.0
    %149 = vmatpush.msra.mxu0 0.0
    %150 = vmatpush.msra.mxu0 0.0
    %151 = vmatpush.msra.mxu0 0.0
    %152 = vmatpush.msra.mxu0 0.0
    %153 = vmatpush.msra.mxu0 0.0
    %154 = vmatpush.msra.mxu0 0.0
    %155 = vmatpush.msra.mxu0 0.0
    %156 = vmatpush.msra.mxu0 0.0
    %157 = vmatpush.msra.mxu0 %v56
    %158 = vmatpush.msra.mxu0 %v55
    %159 = vmatpush.msra.mxu0 %v54
    %160 = vmatpush.msra.mxu0 %v53
    %161 = vmatmul.f32.gmra.mxu0 %v143
    %v162 = vpop.f32.mrf.mxu0
    %v163 = vadd.f32 0.0, %v162
    %164 = vdwg.mxu0
    %v165 = vadd.f32 %v141, %v163
    %v166 = vxor.u32 %v165, 2147483648
    %v167 = vmul.f32 %v166, 1.442695
    %v168 = vpow.pop %v167
    %v169 = vadd.f32 %v168, 1.0
    %v170 = vrcp.pop %v169
    %v171 = vmul.f32 %v169, %v170
    %v172 = vsub.f32 1.0, %v171
    %v173 = vmul.f32 %v170, %v172
    %v174 = vadd.f32 %v170, %v173
    %vm175 = vweird.f32 %v169
    %vm176 = vweird.f32 %v170
    %vm177 = vmor %vm175, %vm176
    %v178 = vsel %vm177, %v170, %v174
    %v179 = vand.u32 2147483647, %v169
    %vm180 = vcmp.eq.f32.partialorder %v179, 8.507059e+37
    %v181 = vand.u32 %v169, 2147483648
    %v182 = vor.u32 1.1754944e-38, %v181
    %v183 = vsel %vm180, %v182, %v178
    %v184 = vmul.f32 1.0, %v183
    %v185 = vadd.f32 %v163, %v107
    %187 = vrot.lane.b32.xlu0 %v185, 64
    %v188 = vpop.permute.xlu0 %187
    %v190 = vmul.f32 %v184, %v188
    %192 = vrot.lane.b32.xlu0 %v190, 64
    %v193 = vpop.permute.xlu0 %192
    %v195 = vadd.f32 %v141, %v193
    %v196 = vtanh.pop %v195
    %v197 = vsub.f32 1.0, %v184
    %199 = vrot.lane.b32.xlu0 %v196, 96
    %v200 = vpop.permute.xlu0 %199
    %v202 = vmul.f32 %v197, %v200
    %203 = vrot.lane.b32.xlu0 %v139, 32
    %v204 = vpop.permute.xlu0 %203
    %v206 = vmul.f32 %v184, %v204
    %v207 = vadd.f32 %v202, %v206
    %209 = vrot.lane.b32.xlu0 %v207, 96
    %v210 = vpop.permute.xlu0 %209
    %212 = vst.msk [vmem:[#allocation2] sm:$0x3] %vm136, %v210
    %s213 = scalar_lea.vmem [#allocation8], 2
    %214 = vst.msk [vmem:[%s213] sm:$0x3] %vm136, %v210
    %v215 = vld [vmem:[#allocation2] sm:$0x3]
    %s216 = scalar_lea.vmem [#allocation3], 4
    %v217 = vld [vmem:[%s216] sm:$0x3]
    %v219 = vsel %vm60, %v215, 0
    %221 = vmatpush.msra.mxu0 0.0
    %222 = vmatpush.msra.mxu0 0.0
    %223 = vmatpush.msra.mxu0 0.0
    %224 = vmatpush.msra.mxu0 0.0
    %225 = vmatpush.msra.mxu0 0.0
    %226 = vmatpush.msra.mxu0 0.0
    %227 = vmatpush.msra.mxu0 0.0
    %228 = vmatpush.msra.mxu0 0.0
    %229 = vmatpush.msra.mxu0 0.0
    %230 = vmatpush.msra.mxu0 0.0
    %231 = vmatpush.msra.mxu0 0.0
    %232 = vmatpush.msra.mxu0 0.0
    %233 = vmatpush.msra.mxu0 %v56
    %234 = vmatpush.msra.mxu0 %v55
    %235 = vmatpush.msra.mxu0 %v54
    %236 = vmatpush.msra.mxu0 %v53
    %237 = vmatmul.f32.gmra.mxu0 %v219
    %v238 = vpop.f32.mrf.mxu0
    %v239 = vadd.f32 0.0, %v238
    %240 = vdwg.mxu0
    %v241 = vadd.f32 %v217, %v239
    %v242 = vxor.u32 %v241, 2147483648
    %v243 = vmul.f32 %v242, 1.442695
    %v244 = vpow.pop %v243
    %v245 = vadd.f32 %v244, 1.0
    %v246 = vrcp.pop %v245
    %v247 = vmul.f32 %v245, %v246
    %v248 = vsub.f32 1.0, %v247
    %v249 = vmul.f32 %v246, %v248
    %v250 = vadd.f32 %v246, %v249
    %vm251 = vweird.f32 %v245
    %vm252 = vweird.f32 %v246
    %vm253 = vmor %vm251, %vm252
    %v254 = vsel %vm253, %v246, %v250
    %v255 = vand.u32 2147483647, %v245
    %vm256 = vcmp.eq.f32.partialorder %v255, 8.507059e+37
    %v257 = vand.u32 %v245, 2147483648
    %v258 = vor.u32 1.1754944e-38, %v257
    %v259 = vsel %vm256, %v258, %v254
    %v260 = vmul.f32 1.0, %v259
    %v261 = vadd.f32 %v239, %v107
    %263 = vrot.lane.b32.xlu0 %v261, 64
    %v264 = vpop.permute.xlu0 %263
    %v266 = vmul.f32 %v260, %v264
    %268 = vrot.lane.b32.xlu0 %v266, 64
    %v269 = vpop.permute.xlu0 %268
    %v271 = vadd.f32 %v217, %v269
    %v272 = vtanh.pop %v271
    %v273 = vsub.f32 1.0, %v260
    %275 = vrot.lane.b32.xlu0 %v272, 96
    %v276 = vpop.permute.xlu0 %275
    %v278 = vmul.f32 %v273, %v276
    %279 = vrot.lane.b32.xlu0 %v215, 32
    %v280 = vpop.permute.xlu0 %279
    %v282 = vmul.f32 %v260, %v280
    %v283 = vadd.f32 %v278, %v282
    %285 = vrot.lane.b32.xlu0 %v283, 96
    %v286 = vpop.permute.xlu0 %285
    %288 = vst.msk [vmem:[#allocation2] sm:$0x3] %vm136, %v286
    %s289 = scalar_lea.vmem [#allocation8], 4
    %290 = vst.msk [vmem:[%s289] sm:$0x3] %vm136, %v286
    %v291 = vld [vmem:[#allocation2] sm:$0x3]
    %s292 = scalar_lea.vmem [#allocation3], 6
    %v293 = vld [vmem:[%s292] sm:$0x3]
    %v295 = vsel %vm60, %v291, 0
    %297 = vmatpush.msra.mxu0 0.0
    %298 = vmatpush.msra.mxu0 0.0
    %299 = vmatpush.msra.mxu0 0.0
    %300 = vmatpush.msra.mxu0 0.0
    %301 = vmatpush.msra.mxu0 0.0
    %302 = vmatpush.msra.mxu0 0.0
    %303 = vmatpush.msra.mxu0 0.0
    %304 = vmatpush.msra.mxu0 0.0
    %305 = vmatpush.msra.mxu0 0.0
    %306 = vmatpush.msra.mxu0 0.0
    %307 = vmatpush.msra.mxu0 0.0
    %308 = vmatpush.msra.mxu0 0.0
    %309 = vmatpush.msra.mxu0 %v56
    %310 = vmatpush.msra.mxu0 %v55
    %311 = vmatpush.msra.mxu0 %v54
    %312 = vmatpush.msra.mxu0 %v53
    %313 = vmatmul.f32.gmra.mxu0 %v295
    %v314 = vpop.f32.mrf.mxu0
    %v315 = vadd.f32 0.0, %v314
    %316 = vdwg.mxu0
    %v317 = vadd.f32 %v293, %v315
    %v318 = vxor.u32 %v317, 2147483648
    %v319 = vmul.f32 %v318, 1.442695
    %v320 = vpow.pop %v319
    %v321 = vadd.f32 %v320, 1.0
    %v322 = vrcp.pop %v321
    %v323 = vmul.f32 %v321, %v322
    %v324 = vsub.f32 1.0, %v323
    %v325 = vmul.f32 %v322, %v324
    %v326 = vadd.f32 %v322, %v325
    %vm327 = vweird.f32 %v321
    %vm328 = vweird.f32 %v322
    %vm329 = vmor %vm327, %vm328
    %v330 = vsel %vm329, %v322, %v326
    %v331 = vand.u32 2147483647, %v321
    %vm332 = vcmp.eq.f32.partialorder %v331, 8.507059e+37
    %v333 = vand.u32 %v321, 2147483648
    %v334 = vor.u32 1.1754944e-38, %v333
    %v335 = vsel %vm332, %v334, %v330
    %v336 = vmul.f32 1.0, %v335
    %v337 = vadd.f32 %v315, %v107
    %339 = vrot.lane.b32.xlu0 %v337, 64
    %v340 = vpop.permute.xlu0 %339
    %v342 = vmul.f32 %v336, %v340
    %344 = vrot.lane.b32.xlu0 %v342, 64
    %v345 = vpop.permute.xlu0 %344
    %v347 = vadd.f32 %v293, %v345
    %v348 = vtanh.pop %v347
    %v349 = vsub.f32 1.0, %v336
    %351 = vrot.lane.b32.xlu0 %v348, 96
    %v352 = vpop.permute.xlu0 %351
    %v354 = vmul.f32 %v349, %v352
    %355 = vrot.lane.b32.xlu0 %v291, 32
    %v356 = vpop.permute.xlu0 %355
    %v358 = vmul.f32 %v336, %v356
    %v359 = vadd.f32 %v354, %v358
    %361 = vrot.lane.b32.xlu0 %v359, 96
    %v362 = vpop.permute.xlu0 %361
    %364 = vst.msk [vmem:[#allocation2] sm:$0x3] %vm136, %v362
    %s365 = scalar_lea.vmem [#allocation8], 6
    %366 = vst.msk [vmem:[%s365] sm:$0x3] %vm136, %v362
    %v367 = vld [vmem:[#allocation2] sm:$0x3]
    %s368 = scalar_lea.vmem [#allocation3], 8
    %v369 = vld [vmem:[%s368] sm:$0x3]
    %v371 = vsel %vm60, %v367, 0
    %373 = vmatpush.msra.mxu0 0.0
    %374 = vmatpush.msra.mxu0 0.0
    %375 = vmatpush.msra.mxu0 0.0
    %376 = vmatpush.msra.mxu0 0.0
    %377 = vmatpush.msra.mxu0 0.0
    %378 = vmatpush.msra.mxu0 0.0
    %379 = vmatpush.msra.mxu0 0.0
    %380 = vmatpush.msra.mxu0 0.0
    %381 = vmatpush.msra.mxu0 0.0
    %382 = vmatpush.msra.mxu0 0.0
    %383 = vmatpush.msra.mxu0 0.0
    %384 = vmatpush.msra.mxu0 0.0
    %385 = vmatpush.msra.mxu0 %v56
    %386 = vmatpush.msra.mxu0 %v55
    %387 = vmatpush.msra.mxu0 %v54
    %388 = vmatpush.msra.mxu0 %v53
    %389 = vmatmul.f32.gmra.mxu0 %v371
    %v390 = vpop.f32.mrf.mxu0
    %v391 = vadd.f32 0.0, %v390
    %392 = vdwg.mxu0
    %v393 = vadd.f32 %v369, %v391
    %v394 = vxor.u32 %v393, 2147483648
    %v395 = vmul.f32 %v394, 1.442695
    %v396 = vpow.pop %v395
    %v397 = vadd.f32 %v396, 1.0
    %v398 = vrcp.pop %v397
    %v399 = vmul.f32 %v397, %v398
    %v400 = vsub.f32 1.0, %v399
    %v401 = vmul.f32 %v398, %v400
    %v402 = vadd.f32 %v398, %v401
    %vm403 = vweird.f32 %v397
    %vm404 = vweird.f32 %v398
    %vm405 = vmor %vm403, %vm404
    %v406 = vsel %vm405, %v398, %v402
    %v407 = vand.u32 2147483647, %v397
    %vm408 = vcmp.eq.f32.partialorder %v407, 8.507059e+37
    %v409 = vand.u32 %v397, 2147483648
    %v410 = vor.u32 1.1754944e-38, %v409
    %v411 = vsel %vm408, %v410, %v406
    %v412 = vmul.f32 1.0, %v411
    %v413 = vadd.f32 %v391, %v107
    %415 = vrot.lane.b32.xlu0 %v413, 64
    %v416 = vpop.permute.xlu0 %415
    %v418 = vmul.f32 %v412, %v416
    %420 = vrot.lane.b32.xlu0 %v418, 64
    %v421 = vpop.permute.xlu0 %420
    %v423 = vadd.f32 %v369, %v421
    %v424 = vtanh.pop %v423
    %v425 = vsub.f32 1.0, %v412
    %427 = vrot.lane.b32.xlu0 %v424, 96
    %v428 = vpop.permute.xlu0 %427
    %v430 = vmul.f32 %v425, %v428
    %431 = vrot.lane.b32.xlu0 %v367, 32
    %v432 = vpop.permute.xlu0 %431
    %v434 = vmul.f32 %v412, %v432
    %v435 = vadd.f32 %v430, %v434
    %437 = vrot.lane.b32.xlu0 %v435, 96
    %v438 = vpop.permute.xlu0 %437
    %440 = vst.msk [vmem:[#allocation2] sm:$0x3] %vm136, %v438
    %s441 = scalar_lea.vmem [#allocation8], 8
    %442 = vst.msk [vmem:[%s441] sm:$0x3] %vm136, %v438
    %v443 = vld [vmem:[#allocation2] sm:$0x3]
    %s444 = scalar_lea.vmem [#allocation3], 10
    %v445 = vld [vmem:[%s444] sm:$0x3]
    %v447 = vsel %vm60, %v443, 0
    %449 = vmatpush.msra.mxu0 0.0
    %450 = vmatpush.msra.mxu0 0.0
    %451 = vmatpush.msra.mxu0 0.0
    %452 = vmatpush.msra.mxu0 0.0
    %453 = vmatpush.msra.mxu0 0.0
    %454 = vmatpush.msra.mxu0 0.0
    %455 = vmatpush.msra.mxu0 0.0
    %456 = vmatpush.msra.mxu0 0.0
    %457 = vmatpush.msra.mxu0 0.0
    %458 = vmatpush.msra.mxu0 0.0
    %459 = vmatpush.msra.mxu0 0.0
    %460 = vmatpush.msra.mxu0 0.0
    %461 = vmatpush.msra.mxu0 %v56
    %462 = vmatpush.msra.mxu0 %v55
    %463 = vmatpush.msra.mxu0 %v54
    %464 = vmatpush.msra.mxu0 %v53
    %465 = vmatmul.f32.gmra.mxu0 %v447
    %v466 = vpop.f32.mrf.mxu0
    %v467 = vadd.f32 0.0, %v466
    %468 = vdwg.mxu0
    %v469 = vadd.f32 %v445, %v467
    %v470 = vxor.u32 %v469, 2147483648
    %v471 = vmul.f32 %v470, 1.442695
    %v472 = vpow.pop %v471
    %v473 = vadd.f32 %v472, 1.0
    %v474 = vrcp.pop %v473
    %v475 = vmul.f32 %v473, %v474
    %v476 = vsub.f32 1.0, %v475
    %v477 = vmul.f32 %v474, %v476
    %v478 = vadd.f32 %v474, %v477
    %vm479 = vweird.f32 %v473
    %vm480 = vweird.f32 %v474
    %vm481 = vmor %vm479, %vm480
    %v482 = vsel %vm481, %v474, %v478
    %v483 = vand.u32 2147483647, %v473
    %vm484 = vcmp.eq.f32.partialorder %v483, 8.507059e+37
    %v485 = vand.u32 %v473, 2147483648
    %v486 = vor.u32 1.1754944e-38, %v485
    %v487 = vsel %vm484, %v486, %v482
    %v488 = vmul.f32 1.0, %v487
    %v489 = vadd.f32 %v467, %v107
    %491 = vrot.lane.b32.xlu0 %v489, 64
    %v492 = vpop.permute.xlu0 %491
    %v494 = vmul.f32 %v488, %v492
    %496 = vrot.lane.b32.xlu0 %v494, 64
    %v497 = vpop.permute.xlu0 %496
    %v499 = vadd.f32 %v445, %v497
    %v500 = vtanh.pop %v499
    %v501 = vsub.f32 1.0, %v488
    %503 = vrot.lane.b32.xlu0 %v500, 96
    %v504 = vpop.permute.xlu0 %503
    %v506 = vmul.f32 %v501, %v504
    %507 = vrot.lane.b32.xlu0 %v443, 32
    %v508 = vpop.permute.xlu0 %507
    %v510 = vmul.f32 %v488, %v508
    %v511 = vadd.f32 %v506, %v510
    %513 = vrot.lane.b32.xlu0 %v511, 96
    %v514 = vpop.permute.xlu0 %513
    %516 = vst.msk [vmem:[#allocation2] sm:$0x3] %vm136, %v514
    %s517 = scalar_lea.vmem [#allocation8], 10
    %518 = vst.msk [vmem:[%s517] sm:$0x3] %vm136, %v514
    %v519 = vld [vmem:[#allocation2] sm:$0x3]
    %s520 = scalar_lea.vmem [#allocation3], 12
    %v521 = vld [vmem:[%s520] sm:$0x3]
    %v523 = vsel %vm60, %v519, 0
    %525 = vmatpush.msra.mxu0 0.0
    %526 = vmatpush.msra.mxu0 0.0
    %527 = vmatpush.msra.mxu0 0.0
    %528 = vmatpush.msra.mxu0 0.0
    %529 = vmatpush.msra.mxu0 0.0
    %530 = vmatpush.msra.mxu0 0.0
    %531 = vmatpush.msra.mxu0 0.0
    %532 = vmatpush.msra.mxu0 0.0
    %533 = vmatpush.msra.mxu0 0.0
    %534 = vmatpush.msra.mxu0 0.0
    %535 = vmatpush.msra.mxu0 0.0
    %536 = vmatpush.msra.mxu0 0.0
    %537 = vmatpush.msra.mxu0 %v56
    %538 = vmatpush.msra.mxu0 %v55
    %539 = vmatpush.msra.mxu0 %v54
    %540 = vmatpush.msra.mxu0 %v53
    %541 = vmatmul.f32.gmra.mxu0 %v523
    %v542 = vpop.f32.mrf.mxu0
    %v543 = vadd.f32 0.0, %v542
    %544 = vdwg.mxu0
    %v545 = vadd.f32 %v521, %v543
    %v546 = vxor.u32 %v545, 2147483648
    %v547 = vmul.f32 %v546, 1.442695
    %v548 = vpow.pop %v547
    %v549 = vadd.f32 %v548, 1.0
    %v550 = vrcp.pop %v549
    %v551 = vmul.f32 %v549, %v550
    %v552 = vsub.f32 1.0, %v551
    %v553 = vmul.f32 %v550, %v552
    %v554 = vadd.f32 %v550, %v553
    %vm555 = vweird.f32 %v549
    %vm556 = vweird.f32 %v550
    %vm557 = vmor %vm555, %vm556
    %v558 = vsel %vm557, %v550, %v554
    %v559 = vand.u32 2147483647, %v549
    %vm560 = vcmp.eq.f32.partialorder %v559, 8.507059e+37
    %v561 = vand.u32 %v549, 2147483648
    %v562 = vor.u32 1.1754944e-38, %v561
    %v563 = vsel %vm560, %v562, %v558
    %v564 = vmul.f32 1.0, %v563
    %v565 = vadd.f32 %v543, %v107
    %567 = vrot.lane.b32.xlu0 %v565, 64
    %v568 = vpop.permute.xlu0 %567
    %v570 = vmul.f32 %v564, %v568
    %572 = vrot.lane.b32.xlu0 %v570, 64
    %v573 = vpop.permute.xlu0 %572
    %v575 = vadd.f32 %v521, %v573
    %v576 = vtanh.pop %v575
    %v577 = vsub.f32 1.0, %v564
    %579 = vrot.lane.b32.xlu0 %v576, 96
    %v580 = vpop.permute.xlu0 %579
    %v582 = vmul.f32 %v577, %v580
    %583 = vrot.lane.b32.xlu0 %v519, 32
    %v584 = vpop.permute.xlu0 %583
    %v586 = vmul.f32 %v564, %v584
    %v587 = vadd.f32 %v582, %v586
    %589 = vrot.lane.b32.xlu0 %v587, 96
    %v590 = vpop.permute.xlu0 %589
    %592 = vst.msk [vmem:[#allocation2] sm:$0x3] %vm136, %v590
    %s593 = scalar_lea.vmem [#allocation8], 12
    %594 = vst.msk [vmem:[%s593] sm:$0x3] %vm136, %v590
    %v595 = vld [vmem:[#allocation2] sm:$0x3]
    %s596 = scalar_lea.vmem [#allocation3], 14
    %v597 = vld [vmem:[%s596] sm:$0x3]
    %v599 = vsel %vm60, %v595, 0
    %601 = vmatpush.msra.mxu0 0.0
    %602 = vmatpush.msra.mxu0 0.0
    %603 = vmatpush.msra.mxu0 0.0
    %604 = vmatpush.msra.mxu0 0.0
    %605 = vmatpush.msra.mxu0 0.0
    %606 = vmatpush.msra.mxu0 0.0
    %607 = vmatpush.msra.mxu0 0.0
    %608 = vmatpush.msra.mxu0 0.0
    %609 = vmatpush.msra.mxu0 0.0
    %610 = vmatpush.msra.mxu0 0.0
    %611 = vmatpush.msra.mxu0 0.0
    %612 = vmatpush.msra.mxu0 0.0
    %613 = vmatpush.msra.mxu0 %v56
    %614 = vmatpush.msra.mxu0 %v55
    %615 = vmatpush.msra.mxu0 %v54
    %616 = vmatpush.msra.mxu0 %v53
    %617 = vmatmul.f32.gmra.mxu0 %v599
    %v618 = vpop.f32.mrf.mxu0
    %v619 = vadd.f32 0.0, %v618
    %620 = vdwg.mxu0
    %v621 = vadd.f32 %v597, %v619
    %v622 = vxor.u32 %v621, 2147483648
    %v623 = vmul.f32 %v622, 1.442695
    %v624 = vpow.pop %v623
    %v625 = vadd.f32 %v624, 1.0
    %v626 = vrcp.pop %v625
    %v627 = vmul.f32 %v625, %v626
    %v628 = vsub.f32 1.0, %v627
    %v629 = vmul.f32 %v626, %v628
    %v630 = vadd.f32 %v626, %v629
    %vm631 = vweird.f32 %v625
    %vm632 = vweird.f32 %v626
    %vm633 = vmor %vm631, %vm632
    %v634 = vsel %vm633, %v626, %v630
    %v635 = vand.u32 2147483647, %v625
    %vm636 = vcmp.eq.f32.partialorder %v635, 8.507059e+37
    %v637 = vand.u32 %v625, 2147483648
    %v638 = vor.u32 1.1754944e-38, %v637
    %v639 = vsel %vm636, %v638, %v634
    %v640 = vmul.f32 1.0, %v639
    %v641 = vadd.f32 %v619, %v107
    %643 = vrot.lane.b32.xlu0 %v641, 64
    %v644 = vpop.permute.xlu0 %643
    %v646 = vmul.f32 %v640, %v644
    %648 = vrot.lane.b32.xlu0 %v646, 64
    %v649 = vpop.permute.xlu0 %648
    %v651 = vadd.f32 %v597, %v649
    %v652 = vtanh.pop %v651
    %v653 = vsub.f32 1.0, %v640
    %655 = vrot.lane.b32.xlu0 %v652, 96
    %v656 = vpop.permute.xlu0 %655
    %v658 = vmul.f32 %v653, %v656
    %659 = vrot.lane.b32.xlu0 %v595, 32
    %v660 = vpop.permute.xlu0 %659
    %v662 = vmul.f32 %v640, %v660
    %v663 = vadd.f32 %v658, %v662
    %665 = vrot.lane.b32.xlu0 %v663, 96
    %v666 = vpop.permute.xlu0 %665
    %668 = vst.msk [vmem:[#allocation2] sm:$0x3] %vm136, %v666
    %s669 = scalar_lea.vmem [#allocation8], 14
    %670 = vst.msk [vmem:[%s669] sm:$0x3] %vm136, %v666
    // Predicated region
    $region26: #{tpu_custom_call.1} parent=1 // pred_check
      _
    $region27: #{tpu_custom_call.1} parent=1 // pred_check_branch
      %672 = sbr.rel (0) target = $region29
    $region28: #{tpu_custom_call.1} parent=1 // pred_region
      %674 = vsyncadd [#allocation5], 0
      %s675 = sshll.u32 [#allocation8], 4
      %s676 = int_to_ptr.vmem [resolvable:$true] %s675
      %s677 = sshll.u32 %s3, 4
      %s678 = int_to_ptr.hbm [resolvable:$true] %s677
      %683 = dma.vmem_to_hbm [thread:$0]  %s676, 256, %s678, [#allocation5], 32, 32, 2
    $region29: #{tpu_custom_call.1} parent=1 // pred_fallthru
      _
    // Predicated region
    $region30: #{tpu_custom_call.1} parent=1 // pred_check
      _
    $region31: #{tpu_custom_call.1} parent=1 // pred_check_branch
      %685 = sbr.rel (0) target = $region33
    $region32: #{tpu_custom_call.1} parent=1 // pred_region
      %687 = dma.done [#allocation5], 256
    $region33: #{tpu_custom_call.1} parent=1 // pred_fallthru
      _
    %688 = vsyncpa [#allocation4], 1
    %689 = vsyncpa [#allocation7], 1
    %690 = vsyncpa [#allocation5], 1

</llo_original>
